<compile_context>
chip_gen: v7x
topology: tpu7x:2x2x1
jax: 0.10.0
libtpu: 0.0.40
codegen_flags: <defaults>
</compile_context>

<pallas_src>
import jax
import jax.numpy as jnp
from jax.experimental import pallas as pl
from jax.experimental.pallas import tpu as pltpu

DROPOUT_P = 0.2          # matches `dropout = 0.2` (training-mode semantics)
NEG_INF = -1e30          # large finite negative instead of -inf (avoids inf-inf NaN)


def head_kernel(x_ref, wk_ref, wq_ref, wv_ref, keep_ref, o_ref):
    B, T, C = x_ref.shape
    H = wk_ref.shape[1]

    # ---- QKV projections: fold batch into the MXU M dimension -------------------
    x2 = x_ref[...].reshape(B * T, C)                                   # bf16 (B*T, C)
    k = jnp.dot(x2, wk_ref[...], preferred_element_type=jnp.float32)   # (B*T, H) f32
    q = jnp.dot(x2, wq_ref[...], preferred_element_type=jnp.float32)
    v = jnp.dot(x2, wv_ref[...], preferred_element_type=jnp.float32)

    kb = k.reshape(B, T, H).astype(jnp.bfloat16)
    qb = q.reshape(B, T, H).astype(jnp.bfloat16)
    vb = v.reshape(B, T, H).astype(jnp.bfloat16)

    # ---- attention scores: contract head dims directly (no explicit k.T) --------
    scale = float(H) ** (-0.5)                                          # head_size ** -0.5
    scores = jax.lax.dot_general(
        qb, kb,
        dimension_numbers=(((2,), (2,)), ((0,), (0,))),                 # q·k over H, batch B
        preferred_element_type=jnp.float32,
    ) * scale                                                           # (B, T, T) f32

    # ---- causal mask generated in-kernel (== module's tril masking) -------------
    row = jax.lax.broadcasted_iota(jnp.int32, (T, T), 0)
    col = jax.lax.broadcasted_iota(jnp.int32, (T, T), 1)
    causal = (row >= col)[None, :, :]                                   # (1, T, T)
    scores = jnp.where(causal, scores, NEG_INF)

    # ---- softmax + dropout; fold both rescales into one multiplier --------------
    m = jnp.max(scores, axis=-1, keepdims=True)
    p = jnp.exp(scores - m)                                             # unnormalised probs
    l = jnp.sum(p, axis=-1, keepdims=True)
    inv = 1.0 / (l * (1.0 - DROPOUT_P))                                 # softmax + dropout scale
    w = (p * keep_ref[...] * inv).astype(jnp.bfloat16)                  # (B, T, T)

    # ---- weighted sum of values --------------------------------------------------
    out = jax.lax.dot_general(
        w, vb,
        dimension_numbers=(((2,), (1,)), ((0,), (0,))),                 # w·v over T, batch B
        preferred_element_type=jnp.float32,
    )                                                                   # (B, T, H) f32
    o_ref[...] = out.astype(o_ref.dtype)


def head_forward(x, wk, wq, wv, keep_mask):
    """x: (B, T, C) f32. wk/wq/wv: PyTorch-layout nn.Linear weights, shape (H, C).
    keep_mask: (B, T, T) {0,1} dropout keep mask (training-mode nn.Dropout)."""
    B, T, C = x.shape
    H = wk.shape[0]

    # bf16 MXU inputs; accumulation stays f32 inside the kernel.
    x_bf = x.astype(jnp.bfloat16)
    wk_t = wk.T.astype(jnp.bfloat16)                                    # (C, H)
    wq_t = wq.T.astype(jnp.bfloat16)
    wv_t = wv.T.astype(jnp.bfloat16)
    keep = keep_mask.astype(jnp.float32)

    grid_spec = pl.GridSpec(
        grid=(1,),  # single step: batch is folded into the matmul M dimension
        in_specs=[
            pl.BlockSpec((B, T, C), lambda i: (0, 0, 0)),
            pl.BlockSpec((C, H), lambda i: (0, 0)),
            pl.BlockSpec((C, H), lambda i: (0, 0)),
            pl.BlockSpec((C, H), lambda i: (0, 0)),
            pl.BlockSpec((B, T, T), lambda i: (0, 0, 0)),
        ],
        out_specs=pl.BlockSpec((B, T, H), lambda i: (0, 0, 0)),
    )

    return pl.pallas_call(
        head_kernel,
        out_shape=jax.ShapeDtypeStruct((B, T, H), jnp.float32),
        grid_spec=grid_spec,
        compiler_params=pltpu.CompilerParams(
            dimension_semantics=("arbitrary",),  # trivial 1-step grid
        ),
    )(x_bf, wk_t, wq_t, wv_t, keep)


if __name__ == "__main__":
    # Small config consistent with the module: Head(n_emb=32, block_size=8, head_size=16),
    # sequence length T == block_size (the only case in which the module's mask broadcast
    # is well defined).
    B, T, C, H = 2, 8, 32, 16

    key = jax.random.PRNGKey(0)
    kx, kk, kq, kv, kd = jax.random.split(key, 5)

    x = jax.random.normal(kx, (B, T, C), dtype=jnp.float32)

    # nn.Linear(n_emb, head_size, bias=False): weight (H, C), init U(-1/sqrt(C), 1/sqrt(C)).
    bound = 1.0 / (C ** 0.5)
    wk = jax.random.uniform(kk, (H, C), jnp.float32, -bound, bound)
    wq = jax.random.uniform(kq, (H, C), jnp.float32, -bound, bound)
    wv = jax.random.uniform(kv, (H, C), jnp.float32, -bound, bound)

    # nn.Dropout(0.2) training-mode keep mask (deterministic per key).
    keep = jax.random.bernoulli(kd, 1.0 - DROPOUT_P, (B, T, T)).astype(jnp.float32)

    out = head_forward(x, wk, wq, wv, keep)
    out = jax.block_until_ready(out)

    # Pure-JAX f32 reference using the same dropout mask (loose tol: kernel uses bf16 MXU inputs).
    k_r = x @ wk.T
    q_r = x @ wq.T
    v_r = x @ wv.T
    s_r = (q_r @ jnp.swapaxes(k_r, -1, -2)) * (H ** -0.5)
    tril = jnp.tril(jnp.ones((T, T), jnp.float32))
    s_r = jnp.where(tril == 0.0, NEG_INF, s_r)
    w_r = jax.nn.softmax(s_r, axis=-1) * keep / (1.0 - DROPOUT_P)
    ref = w_r @ v_r

    assert out.shape == (B, T, H), out.shape
    assert bool(jnp.all(jnp.isfinite(out)))
    assert bool(jnp.allclose(out, ref, atol=1e-1, rtol=1e-1))
    print("KERNEL_OK")
</pallas_src>

<mosaic_0001>
module attributes {stable_mosaic.version = 11 : i64} {
  func.func @head_kernel(%arg0: i32, %arg1: memref<2x8x32xbf16, #tpu.memory_space<vmem>>, %arg2: memref<32x16xbf16, #tpu.memory_space<vmem>>, %arg3: memref<32x16xbf16, #tpu.memory_space<vmem>>, %arg4: memref<32x16xbf16, #tpu.memory_space<vmem>>, %arg5: memref<2x8x8xf32, #tpu.memory_space<vmem>>, %arg6: memref<2x8x16xf32, #tpu.memory_space<vmem>>) attributes {dimension_semantics = [#tpu.dimension_semantics<arbitrary>], iteration_bounds = array<i64: 1>, scalar_prefetch = 0 : i64, scratch_operands = 0 : i64, tpu.core_type = #tpu.core_type<tc>, window_params = [{pipeline_mode = #tpu.pipeline_mode<synchronous>, transform_indices = @transform_0, window_bounds = array<i64: 2, 8, 32>}, {pipeline_mode = #tpu.pipeline_mode<synchronous>, transform_indices = @transform_1, window_bounds = array<i64: 32, 16>}, {pipeline_mode = #tpu.pipeline_mode<synchronous>, transform_indices = @transform_2, window_bounds = array<i64: 32, 16>}, {pipeline_mode = #tpu.pipeline_mode<synchronous>, transform_indices = @transform_3, window_bounds = array<i64: 32, 16>}, {pipeline_mode = #tpu.pipeline_mode<synchronous>, transform_indices = @transform_4, window_bounds = array<i64: 2, 8, 8>}, {pipeline_mode = #tpu.pipeline_mode<synchronous>, transform_indices = @transform_5, window_bounds = array<i64: 2, 8, 16>}]} {
    %c0 = arith.constant 0 : index
    %c0_0 = arith.constant 0 : index
    %c0_1 = arith.constant 0 : index
    %0 = vector.load %arg1[%c0, %c0_0, %c0_1] : memref<2x8x32xbf16, #tpu.memory_space<vmem>>, vector<2x8x32xbf16>
    %1 = vector.shape_cast %0 : vector<2x8x32xbf16> to vector<16x32xbf16>
    %c0_2 = arith.constant 0 : index
    %c0_3 = arith.constant 0 : index
    %2 = vector.load %arg2[%c0_2, %c0_3] : memref<32x16xbf16, #tpu.memory_space<vmem>>, vector<32x16xbf16>
    %cst = arith.constant dense<0.000000e+00> : vector<16x16xf32>
    %3 = tpu.matmul %1, %2, %cst {dimension_numbers = #tpu.dot_dimension_numbers<[1], [0], [0], [1], [0, 0, 1, 1], [], []>} : vector<16x32xbf16>, vector<32x16xbf16>, vector<16x16xf32> -> vector<16x16xf32>
    %c0_4 = arith.constant 0 : index
    %c0_5 = arith.constant 0 : index
    %4 = vector.load %arg3[%c0_4, %c0_5] : memref<32x16xbf16, #tpu.memory_space<vmem>>, vector<32x16xbf16>
    %cst_6 = arith.constant dense<0.000000e+00> : vector<16x16xf32>
    %5 = tpu.matmul %1, %4, %cst_6 {dimension_numbers = #tpu.dot_dimension_numbers<[1], [0], [0], [1], [0, 0, 1, 1], [], []>} : vector<16x32xbf16>, vector<32x16xbf16>, vector<16x16xf32> -> vector<16x16xf32>
    %c0_7 = arith.constant 0 : index
    %c0_8 = arith.constant 0 : index
    %6 = vector.load %arg4[%c0_7, %c0_8] : memref<32x16xbf16, #tpu.memory_space<vmem>>, vector<32x16xbf16>
    %cst_9 = arith.constant dense<0.000000e+00> : vector<16x16xf32>
    %7 = tpu.matmul %1, %6, %cst_9 {dimension_numbers = #tpu.dot_dimension_numbers<[1], [0], [0], [1], [0, 0, 1, 1], [], []>} : vector<16x32xbf16>, vector<32x16xbf16>, vector<16x16xf32> -> vector<16x16xf32>
    %8 = vector.shape_cast %3 : vector<16x16xf32> to vector<2x8x16xf32>
    %9 = arith.truncf %8 : vector<2x8x16xf32> to vector<2x8x16xbf16>
    %10 = vector.shape_cast %5 : vector<16x16xf32> to vector<2x8x16xf32>
    %11 = arith.truncf %10 : vector<2x8x16xf32> to vector<2x8x16xbf16>
    %12 = vector.shape_cast %7 : vector<16x16xf32> to vector<2x8x16xf32>
    %13 = arith.truncf %12 : vector<2x8x16xf32> to vector<2x8x16xbf16>
    %cst_10 = arith.constant dense<0.000000e+00> : vector<2x8x8xf32>
    %14 = tpu.matmul %11, %9, %cst_10 {dimension_numbers = #tpu.dot_dimension_numbers<[2], [2], [1], [1], [0, 0, 0, 1, 1, 1], [0], [0]>} : vector<2x8x16xbf16>, vector<2x8x16xbf16>, vector<2x8x8xf32> -> vector<2x8x8xf32>
    %cst_11 = arith.constant 2.500000e-01 : f32
    %15 = vector.broadcast %cst_11 : f32 to vector<2x8x8xf32>
    %16 = arith.mulf %14, %15 : vector<2x8x8xf32>
    %17 = tpu.iota {dimensions = array<i32: 0>} : vector<8x8xi32>
    %18 = tpu.iota {dimensions = array<i32: 1>} : vector<8x8xi32>
    %19 = arith.cmpi sge, %17, %18 : vector<8x8xi32>
    %20 = vector.shape_cast %19 : vector<8x8xi1> to vector<1x8x8xi1>
    %cst_12 = arith.constant -1.000000e+30 : f32
    %21 = vector.shape_cast %20 : vector<1x8x8xi1> to vector<1x8x8xi1>
    %22 = vector.broadcast %21 : vector<1x8x8xi1> to vector<2x8x8xi1>
    %23 = vector.broadcast %cst_12 : f32 to vector<2x8x8xf32>
    %24 = arith.select %22, %16, %23 : vector<2x8x8xi1>, vector<2x8x8xf32>
    %cst_13 = arith.constant dense<0xFF800000> : vector<2x8xf32>
    %25 = vector.multi_reduction <maximumf>, %24, %cst_13 [2] : vector<2x8x8xf32> to vector<2x8xf32>
    %26 = vector.shape_cast %25 : vector<2x8xf32> to vector<2x8x1xf32>
    %27 = vector.broadcast %26 : vector<2x8x1xf32> to vector<2x8x8xf32>
    %28 = arith.subf %24, %27 : vector<2x8x8xf32>
    %29 = math.exp %28 : vector<2x8x8xf32>
    %cst_14 = arith.constant dense<0.000000e+00> : vector<2x8xf32>
    %30 = vector.multi_reduction <add>, %29, %cst_14 [2] : vector<2x8x8xf32> to vector<2x8xf32>
    %31 = vector.shape_cast %30 : vector<2x8xf32> to vector<2x8x1xf32>
    %cst_15 = arith.constant 8.000000e-01 : f32
    %32 = vector.broadcast %cst_15 : f32 to vector<2x8x1xf32>
    %33 = arith.mulf %31, %32 : vector<2x8x1xf32>
    %cst_16 = arith.constant 1.000000e+00 : f32
    %34 = vector.broadcast %cst_16 : f32 to vector<2x8x1xf32>
    %35 = arith.divf %34, %33 : vector<2x8x1xf32>
    %c0_17 = arith.constant 0 : index
    %c0_18 = arith.constant 0 : index
    %c0_19 = arith.constant 0 : index
    %36 = vector.load %arg5[%c0_17, %c0_18, %c0_19] : memref<2x8x8xf32, #tpu.memory_space<vmem>>, vector<2x8x8xf32>
    %37 = arith.mulf %29, %36 : vector<2x8x8xf32>
    %38 = vector.broadcast %35 : vector<2x8x1xf32> to vector<2x8x8xf32>
    %39 = arith.mulf %37, %38 : vector<2x8x8xf32>
    %40 = arith.truncf %39 : vector<2x8x8xf32> to vector<2x8x8xbf16>
    %cst_20 = arith.constant dense<0.000000e+00> : vector<2x8x16xf32>
    %41 = tpu.matmul %40, %13, %cst_20 {dimension_numbers = #tpu.dot_dimension_numbers<[2], [1], [1], [2], [0, 0, 0, 1, 1, 2], [0], [0]>} : vector<2x8x8xbf16>, vector<2x8x16xbf16>, vector<2x8x16xf32> -> vector<2x8x16xf32>
    %c0_21 = arith.constant 0 : index
    %c0_22 = arith.constant 0 : index
    %c0_23 = arith.constant 0 : index
    %42 = vector.load %arg6[%c0_21, %c0_22, %c0_23] : memref<2x8x16xf32, #tpu.memory_space<vmem>>, vector<2x8x16xf32>
    tpu.vector_store %arg6[%c0_21, %c0_22, %c0_23], %41 {strides = array<i32>} : memref<2x8x16xf32, #tpu.memory_space<vmem>>, vector<2x8x16xf32>,
    return
  }
  func.func @transform_0(%arg0: i32) -> (i32, i32, i32) {
    %c0_i32 = arith.constant 0 : i32
    %c0_i32_0 = arith.constant 0 : i32
    %c0_i32_1 = arith.constant 0 : i32
    %c0_i32_2 = arith.constant 0 : i32
    return %c0_i32, %c0_i32_0, %c0_i32_1 : i32, i32, i32
  }
  func.func @transform_1(%arg0: i32) -> (i32, i32) {
    %c0_i32 = arith.constant 0 : i32
    %c0_i32_0 = arith.constant 0 : i32
    %c0_i32_1 = arith.constant 0 : i32
    return %c0_i32, %c0_i32_0 : i32, i32
  }
  func.func @transform_2(%arg0: i32) -> (i32, i32) {
    %c0_i32 = arith.constant 0 : i32
    %c0_i32_0 = arith.constant 0 : i32
    %c0_i32_1 = arith.constant 0 : i32
    return %c0_i32, %c0_i32_0 : i32, i32
  }
  func.func @transform_3(%arg0: i32) -> (i32, i32) {
    %c0_i32 = arith.constant 0 : i32
    %c0_i32_0 = arith.constant 0 : i32
    %c0_i32_1 = arith.constant 0 : i32
    return %c0_i32, %c0_i32_0 : i32, i32
  }
  func.func @transform_4(%arg0: i32) -> (i32, i32, i32) {
    %c0_i32 = arith.constant 0 : i32
    %c0_i32_0 = arith.constant 0 : i32
    %c0_i32_1 = arith.constant 0 : i32
    %c0_i32_2 = arith.constant 0 : i32
    return %c0_i32, %c0_i32_0, %c0_i32_1 : i32, i32, i32
  }
  func.func @transform_5(%arg0: i32) -> (i32, i32, i32) {
    %c0_i32 = arith.constant 0 : i32
    %c0_i32_0 = arith.constant 0 : i32
    %c0_i32_1 = arith.constant 0 : i32
    %c0_i32_2 = arith.constant 0 : i32
    return %c0_i32, %c0_i32_0, %c0_i32_1 : i32, i32, i32
  }
}

</mosaic_0001>

<llo_original>
// kernel: tpu_custom_call.1
$region0: #{tpu_custom_call.1}
  #allocation0 [shape = 'u32[]', space=smem, size = 0x4, offset = 0x4, fixed_abs, tag = 'smem constant byte address 0x4 - core index']
  #allocation1 [shape = 'u32[144,128]{1,0:T(1,128)}', space=vmem, size = 0x12000, scoped, tag = 'internal scratch']
  %s0 = inlined_call_operand.vmem [shape: bf16[2,8,32], index: 0, kind: input, shape index: {}]
  %s1 = inlined_call_operand.vmem [shape: bf16[32,16], index: 1, kind: input, shape index: {}]
  %s2 = inlined_call_operand.vmem [shape: bf16[32,16], index: 2, kind: input, shape index: {}]
  %s3 = inlined_call_operand.vmem [shape: bf16[32,16], index: 3, kind: input, shape index: {}]
  %s4 = inlined_call_operand.vmem [shape: f32[2,8,8], index: 4, kind: input, shape index: {}]
  %s5 = inlined_call_operand.hbm [shape: f32[2,8,16], index: 5, kind: output, shape index: {}]
  %s6 = sld [smem:[#allocation0]]
  $region30: #{tpu_custom_call.1} parent=0
    _
  %s8 = ssub.s32 1, %s6
  %s9 = scalar_select 0, %s8, %s6
  $region1: #{tpu_custom_call.1} parent=0
    #allocation2 [shape = 'u8[8192]{0}', space=vmem, size = 0x2000, scoped, tag = 'output window, operand 0, single buffered']
    #allocation3 [shape = 's32[1]{0}', space=sflag, size = 0x4, scoped, tag = 'scoped memory for tpu_custom_call.1']
    %10 = vsyncpa [#allocation3], 0
    // Predicated region
    $region2: #{tpu_custom_call.1} parent=1 // pred_check
      _
    $region3: #{tpu_custom_call.1} parent=1 // pred_check_branch
      %12 = sbr.rel (0) target = $region5
    $region4: #{tpu_custom_call.1} parent=1 // pred_region
      _
    $region5: #{tpu_custom_call.1} parent=1 // pred_fallthru
      _
    // Predicated region
    $region6: #{tpu_custom_call.1} parent=1 // pred_check
      _
    $region7: #{tpu_custom_call.1} parent=1 // pred_check_branch
      %14 = sbr.rel (0) target = $region9
    $region8: #{tpu_custom_call.1} parent=1 // pred_region
      _
    $region9: #{tpu_custom_call.1} parent=1 // pred_fallthru
      _
    // Predicated region
    $region10: #{tpu_custom_call.1} parent=1 // pred_check
      _
    $region11: #{tpu_custom_call.1} parent=1 // pred_check_branch
      %16 = sbr.rel (0) target = $region13
    $region12: #{tpu_custom_call.1} parent=1 // pred_region
      _
    $region13: #{tpu_custom_call.1} parent=1 // pred_fallthru
      _
    // Predicated region
    $region14: #{tpu_custom_call.1} parent=1 // pred_check
      _
    $region15: #{tpu_custom_call.1} parent=1 // pred_check_branch
      %18 = sbr.rel (0) target = $region17
    $region16: #{tpu_custom_call.1} parent=1 // pred_region
      _
    $region17: #{tpu_custom_call.1} parent=1 // pred_fallthru
      _
    // Predicated region
    $region18: #{tpu_custom_call.1} parent=1 // pred_check
      _
    $region19: #{tpu_custom_call.1} parent=1 // pred_check_branch
      %20 = sbr.rel (0) target = $region21
    $region20: #{tpu_custom_call.1} parent=1 // pred_region
      _
    $region21: #{tpu_custom_call.1} parent=1 // pred_fallthru
      _
    %v22 = vld [vmem:[%s0] sm:$0xf]
    %v23 = vld [vmem:[%s0 + $0x4] sm:$0xf]
    %v24 = vld [vmem:[%s1] sm:$0xf]
    %v25 = vld [vmem:[%s1 + $0x4] sm:$0xf]
    %v26 = vld [vmem:[%s1 + $0x8] sm:$0xf]
    %v27 = vld [vmem:[%s1 + $0xc] sm:$0xf]
    %v30 = vunpack.c.l.b16 %v22
    %v31 = vunpack.c.l.b16 %v23
    %v32 = vpack.c.b16 %v31, %v30
    %v37 = vunpack.c.l.b16 %v24
    %v38 = vunpack.c.l.b16 %v25
    %v39 = vunpack.c.l.b16 %v26
    %v40 = vunpack.c.l.b16 %v27
    %v41 = vpack.c.b16 %v38, %v37
    %v42 = vpack.c.b16 %v40, %v39
    %vm45 = vcmask 261120
    %v47 = vsel %vm45, %v32, 0
    %49 = vmatprep.subr.bf16.mxu0 0
    %50 = vmatpush1.bf16.msra.mxu0 %v41
    %51 = vmatprep.subr.bf16.mxu0 0
    %52 = vmatpush1.bf16.msra.mxu0 %v42
    %53 = vmatprep.subr.bf16.mxu0 0
    %54 = vmatpush1.bf16.msra.mxu0 0
    %55 = vmatprep.subr.bf16.mxu0 0
    %56 = vmatpush1.bf16.msra.mxu0 0
    %57 = vmatprep.subr.bf16.mxu0 0
    %58 = vmatpush1.bf16.msra.mxu0 0
    %59 = vmatprep.subr.bf16.mxu0 0
    %60 = vmatpush1.bf16.msra.mxu0 0
    %61 = vmatprep.subr.bf16.mxu0 0
    %62 = vmatpush1.bf16.msra.mxu0 0
    %63 = vmatprep.subr.bf16.mxu0 0
    %64 = vmatpush1.bf16.msra.mxu0 0
    %65 = vmatprep.subr.bf16.mxu0 0
    %66 = vmatpush1.bf16.msra.mxu0 0
    %67 = vmatprep.subr.bf16.mxu0 0
    %68 = vmatpush1.bf16.msra.mxu0 0
    %69 = vmatprep.subr.bf16.mxu0 0
    %70 = vmatpush1.bf16.msra.mxu0 0
    %71 = vmatprep.subr.bf16.mxu0 0
    %72 = vmatpush1.bf16.msra.mxu0 0
    %73 = vmatprep.subr.bf16.mxu0 0
    %74 = vmatpush1.bf16.msra.mxu0 0
    %75 = vmatprep.subr.bf16.mxu0 0
    %76 = vmatpush1.bf16.msra.mxu0 0
    %77 = vmatprep.subr.bf16.mxu0 0
    %78 = vmatpush1.bf16.msra.mxu0 0
    %79 = vmatprep.subr.bf16.mxu0 0
    %80 = vmatpush1.bf16.msra.mxu0 0
    %81 = vmatprep.mubr.bf16.mxu0 0
    %82 = vmatmul.mubr.bf16.gmra.mrb[0].mxu0 %v47
    %v83 = vpop.f32.mrb[0].mxu0
    %v84 = vadd.f32 0.0, %v83
    %v85 = vpop.f32.mrb[0].mxu0
    %v86 = vpop.f32.mrb[0].mxu0
    %v87 = vadd.f32 0.0, %v86
    %v88 = vpop.f32.mrb[0].mxu0
    %89 = vdwg.mxu0
    %v90 = vld [vmem:[%s2] sm:$0xf]
    %v91 = vld [vmem:[%s2 + $0x4] sm:$0xf]
    %v92 = vld [vmem:[%s2 + $0x8] sm:$0xf]
    %v93 = vld [vmem:[%s2 + $0xc] sm:$0xf]
    %v98 = vunpack.c.l.b16 %v90
    %v99 = vunpack.c.l.b16 %v91
    %v100 = vunpack.c.l.b16 %v92
    %v101 = vunpack.c.l.b16 %v93
    %v102 = vpack.c.b16 %v99, %v98
    %v103 = vpack.c.b16 %v101, %v100
    %106 = vmatprep.subr.bf16.mxu0 0
    %107 = vmatpush1.bf16.msra.mxu0 %v102
    %108 = vmatprep.subr.bf16.mxu0 0
    %109 = vmatpush1.bf16.msra.mxu0 %v103
    %110 = vmatprep.subr.bf16.mxu0 0
    %111 = vmatpush1.bf16.msra.mxu0 0
    %112 = vmatprep.subr.bf16.mxu0 0
    %113 = vmatpush1.bf16.msra.mxu0 0
    %114 = vmatprep.subr.bf16.mxu0 0
    %115 = vmatpush1.bf16.msra.mxu0 0
    %116 = vmatprep.subr.bf16.mxu0 0
    %117 = vmatpush1.bf16.msra.mxu0 0
    %118 = vmatprep.subr.bf16.mxu0 0
    %119 = vmatpush1.bf16.msra.mxu0 0
    %120 = vmatprep.subr.bf16.mxu0 0
    %121 = vmatpush1.bf16.msra.mxu0 0
    %122 = vmatprep.subr.bf16.mxu0 0
    %123 = vmatpush1.bf16.msra.mxu0 0
    %124 = vmatprep.subr.bf16.mxu0 0
    %125 = vmatpush1.bf16.msra.mxu0 0
    %126 = vmatprep.subr.bf16.mxu0 0
    %127 = vmatpush1.bf16.msra.mxu0 0
    %128 = vmatprep.subr.bf16.mxu0 0
    %129 = vmatpush1.bf16.msra.mxu0 0
    %130 = vmatprep.subr.bf16.mxu0 0
    %131 = vmatpush1.bf16.msra.mxu0 0
    %132 = vmatprep.subr.bf16.mxu0 0
    %133 = vmatpush1.bf16.msra.mxu0 0
    %134 = vmatprep.subr.bf16.mxu0 0
    %135 = vmatpush1.bf16.msra.mxu0 0
    %136 = vmatprep.subr.bf16.mxu0 0
    %137 = vmatpush1.bf16.msra.mxu0 0
    %138 = vmatprep.mubr.bf16.mxu0 0
    %139 = vmatmul.mubr.bf16.gmra.mrb[0].mxu0 %v47
    %v140 = vpop.f32.mrb[0].mxu0
    %v141 = vadd.f32 0.0, %v140
    %v142 = vpop.f32.mrb[0].mxu0
    %v143 = vpop.f32.mrb[0].mxu0
    %v144 = vadd.f32 0.0, %v143
    %v145 = vpop.f32.mrb[0].mxu0
    %146 = vdwg.mxu0
    %v147 = vld [vmem:[%s3] sm:$0xf]
    %v148 = vld [vmem:[%s3 + $0x4] sm:$0xf]
    %v149 = vld [vmem:[%s3 + $0x8] sm:$0xf]
    %v150 = vld [vmem:[%s3 + $0xc] sm:$0xf]
    %v155 = vunpack.c.l.b16 %v147
    %v156 = vunpack.c.l.b16 %v148
    %v157 = vunpack.c.l.b16 %v149
    %v158 = vunpack.c.l.b16 %v150
    %v159 = vpack.c.b16 %v156, %v155
    %v160 = vpack.c.b16 %v158, %v157
    %163 = vmatprep.subr.bf16.mxu0 0
    %164 = vmatpush1.bf16.msra.mxu0 %v159
    %165 = vmatprep.subr.bf16.mxu0 0
    %166 = vmatpush1.bf16.msra.mxu0 %v160
    %167 = vmatprep.subr.bf16.mxu0 0
    %168 = vmatpush1.bf16.msra.mxu0 0
    %169 = vmatprep.subr.bf16.mxu0 0
    %170 = vmatpush1.bf16.msra.mxu0 0
    %171 = vmatprep.subr.bf16.mxu0 0
    %172 = vmatpush1.bf16.msra.mxu0 0
    %173 = vmatprep.subr.bf16.mxu0 0
    %174 = vmatpush1.bf16.msra.mxu0 0
    %175 = vmatprep.subr.bf16.mxu0 0
    %176 = vmatpush1.bf16.msra.mxu0 0
    %177 = vmatprep.subr.bf16.mxu0 0
    %178 = vmatpush1.bf16.msra.mxu0 0
    %179 = vmatprep.subr.bf16.mxu0 0
    %180 = vmatpush1.bf16.msra.mxu0 0
    %181 = vmatprep.subr.bf16.mxu0 0
    %182 = vmatpush1.bf16.msra.mxu0 0
    %183 = vmatprep.subr.bf16.mxu0 0
    %184 = vmatpush1.bf16.msra.mxu0 0
    %185 = vmatprep.subr.bf16.mxu0 0
    %186 = vmatpush1.bf16.msra.mxu0 0
    %187 = vmatprep.subr.bf16.mxu0 0
    %188 = vmatpush1.bf16.msra.mxu0 0
    %189 = vmatprep.subr.bf16.mxu0 0
    %190 = vmatpush1.bf16.msra.mxu0 0
    %191 = vmatprep.subr.bf16.mxu0 0
    %192 = vmatpush1.bf16.msra.mxu0 0
    %193 = vmatprep.subr.bf16.mxu0 0
    %194 = vmatpush1.bf16.msra.mxu0 0
    %195 = vmatprep.mubr.bf16.mxu0 0
    %196 = vmatmul.mubr.bf16.gmra.mrb[0].mxu0 %v47
    %v197 = vpop.f32.mrb[0].mxu0
    %v198 = vadd.f32 0.0, %v197
    %v199 = vpop.f32.mrb[0].mxu0
    %v200 = vpop.f32.mrb[0].mxu0
    %v201 = vadd.f32 0.0, %v200
    %v202 = vpop.f32.mrb[0].mxu0
    %203 = vdwg.mxu0
    %v204 = vpack.c.bf16 %v84, %v84
    %v205 = vpack.c.bf16 %v87, %v87
    %v206 = vpack.c.bf16 %v141, %v141
    %v207 = vpack.c.bf16 %v144, %v144
    %v208 = vpack.c.bf16 %v198, %v198
    %v209 = vpack.c.bf16 %v201, %v201
    %vm210 = vcmask 130048
    %v212 = vsel %vm210, %v206, 0
    %v215 = vsel %vm210, %v204, 0
    %217 = vmatprep.subr.bf16.mxu0 0
    %218 = vmatpush1.bf16.xpose.msra.mxu0 %v215
    %219 = vmatprep.subr.bf16.mxu0 0
    %220 = vmatpush1.bf16.xpose.msra.mxu0 0
    %221 = vmatprep.subr.bf16.mxu0 0
    %222 = vmatpush1.bf16.xpose.msra.mxu0 0
    %223 = vmatprep.subr.bf16.mxu0 0
    %224 = vmatpush1.bf16.xpose.msra.mxu0 0
    %225 = vmatprep.subr.bf16.mxu0 0
    %226 = vmatpush1.bf16.xpose.msra.mxu0 0
    %227 = vmatprep.subr.bf16.mxu0 0
    %228 = vmatpush1.bf16.xpose.msra.mxu0 0
    %229 = vmatprep.subr.bf16.mxu0 0
    %230 = vmatpush1.bf16.xpose.msra.mxu0 0
    %231 = vmatprep.subr.bf16.mxu0 0
    %232 = vmatpush1.bf16.xpose.msra.mxu0 0
    %233 = vmatprep.subr.bf16.mxu0 0
    %234 = vmatpush1.bf16.xpose.msra.mxu0 0
    %235 = vmatprep.subr.bf16.mxu0 0
    %236 = vmatpush1.bf16.xpose.msra.mxu0 0
    %237 = vmatprep.subr.bf16.mxu0 0
    %238 = vmatpush1.bf16.xpose.msra.mxu0 0
    %239 = vmatprep.subr.bf16.mxu0 0
    %240 = vmatpush1.bf16.xpose.msra.mxu0 0
    %241 = vmatprep.subr.bf16.mxu0 0
    %242 = vmatpush1.bf16.xpose.msra.mxu0 0
    %243 = vmatprep.subr.bf16.mxu0 0
    %244 = vmatpush1.bf16.xpose.msra.mxu0 0
    %245 = vmatprep.subr.bf16.mxu0 0
    %246 = vmatpush1.bf16.xpose.msra.mxu0 0
    %247 = vmatprep.subr.bf16.mxu0 0
    %248 = vmatpush1.bf16.xpose.msra.mxu0 0
    %249 = vmatprep.mubr.bf16.mxu0 0
    %250 = vmatmul.mubr.bf16.gmra.mrb[0].mxu0 %v212
    %v251 = vpop.f32.mrb[0].mxu0
    %v252 = vadd.f32 0.0, %v251
    %v253 = vpop.f32.mrb[0].mxu0
    %v254 = vpop.f32.mrb[0].mxu0
    %v255 = vpop.f32.mrb[0].mxu0
    %256 = vdwg.mxu0
    %v258 = vsel %vm210, %v207, 0
    %v261 = vsel %vm210, %v205, 0
    %263 = vmatprep.subr.bf16.mxu0 0
    %264 = vmatpush1.bf16.xpose.msra.mxu0 %v261
    %265 = vmatprep.subr.bf16.mxu0 0
    %266 = vmatpush1.bf16.xpose.msra.mxu0 0
    %267 = vmatprep.subr.bf16.mxu0 0
    %268 = vmatpush1.bf16.xpose.msra.mxu0 0
    %269 = vmatprep.subr.bf16.mxu0 0
    %270 = vmatpush1.bf16.xpose.msra.mxu0 0
    %271 = vmatprep.subr.bf16.mxu0 0
    %272 = vmatpush1.bf16.xpose.msra.mxu0 0
    %273 = vmatprep.subr.bf16.mxu0 0
    %274 = vmatpush1.bf16.xpose.msra.mxu0 0
    %275 = vmatprep.subr.bf16.mxu0 0
    %276 = vmatpush1.bf16.xpose.msra.mxu0 0
    %277 = vmatprep.subr.bf16.mxu0 0
    %278 = vmatpush1.bf16.xpose.msra.mxu0 0
    %279 = vmatprep.subr.bf16.mxu0 0
    %280 = vmatpush1.bf16.xpose.msra.mxu0 0
    %281 = vmatprep.subr.bf16.mxu0 0
    %282 = vmatpush1.bf16.xpose.msra.mxu0 0
    %283 = vmatprep.subr.bf16.mxu0 0
    %284 = vmatpush1.bf16.xpose.msra.mxu0 0
    %285 = vmatprep.subr.bf16.mxu0 0
    %286 = vmatpush1.bf16.xpose.msra.mxu0 0
    %287 = vmatprep.subr.bf16.mxu0 0
    %288 = vmatpush1.bf16.xpose.msra.mxu0 0
    %289 = vmatprep.subr.bf16.mxu0 0
    %290 = vmatpush1.bf16.xpose.msra.mxu0 0
    %291 = vmatprep.subr.bf16.mxu0 0
    %292 = vmatpush1.bf16.xpose.msra.mxu0 0
    %293 = vmatprep.subr.bf16.mxu0 0
    %294 = vmatpush1.bf16.xpose.msra.mxu0 0
    %295 = vmatprep.mubr.bf16.mxu0 0
    %296 = vmatmul.mubr.bf16.gmra.mrb[0].mxu0 %v258
    %v297 = vpop.f32.mrb[0].mxu0
    %v298 = vadd.f32 0.0, %v297
    %v299 = vpop.f32.mrb[0].mxu0
    %v300 = vpop.f32.mrb[0].mxu0
    %v301 = vpop.f32.mrb[0].mxu0
    %302 = vdwg.mxu0
    %v303 = vmul.f32 %v252, 0.25
    %v304 = vmul.f32 %v298, 0.25
    %v305 = vlaneseq
    %v306 = vshrl.u32 %v305, 7
    %v307 = vlaneseq
    %v308 = vand.u32 %v307, 127
    %vm309 = vcmp.ge.s32.totalorder %v306, %v308
    %v310 = vsel %vm309, 1, 0
    %vm311 = vcmp.eq.s32.totalorder %v310, 1
    %v312 = vsel %vm311, %v303, -1e+30
    %v313 = vsel %vm311, %v304, -1e+30
    %vm314 = vcmask 64512
    %v315 = vsel %vm314, %v312, -inf
    %316 = vmax.xlane.f32.xlu0 %v315
    %v317 = vpop.xlane.xlu0 %316
    %v318 = vsel %vm314, %v313, -inf
    %319 = vmax.xlane.f32.xlu0 %v318
    %v320 = vpop.xlane.xlu0 %319
    %v321 = vsub.f32 %v312, %v317
    %v322 = vsub.f32 %v313, %v320
    %v323 = vmul.f32 %v321, 1.442695
    %v324 = vpow.pop %v323
    %v325 = vmul.f32 %v322, 1.442695
    %v326 = vpow.pop %v325
    %v327 = vsel %vm314, %v324, 0.0
    %328 = vadd.xlane.f32.xlu0 %v327
    %v329 = vpop.xlane.xlu0 %328
    %v330 = vsel %vm314, %v326, 0.0
    %331 = vadd.xlane.f32.xlu0 %v330
    %v332 = vpop.xlane.xlu0 %331
    %v333 = vmul.f32 %v329, 0.8
    %v334 = vmul.f32 %v332, 0.8
    %v335 = vrcp.pop %v333
    %v336 = vmul.f32 1.0, %v335
    %v337 = vrcp.pop %v334
    %v338 = vmul.f32 1.0, %v337
    %v339 = vld [vmem:[%s4] sm:$0xff]
    %v340 = vld [vmem:[%s4 + $0x8] sm:$0xff]
    %v341 = vmul.f32 %v324, %v339
    %v342 = vmul.f32 %v326, %v340
    %v343 = vmul.f32 %v341, %v336
    %v344 = vmul.f32 %v342, %v338
    %v345 = vpack.c.bf16 %v343, %v343
    %v346 = vpack.c.bf16 %v344, %v344
    %v348 = vsel %vm314, %v345, 0
    %vm350 = vcmask 1043456
    %v352 = vsel %vm350, %v208, 0
    %354 = vmatprep.subr.bf16.mxu0 0
    %355 = vmatpush1.bf16.msra.mxu0 %v352
    %356 = vmatprep.subr.bf16.mxu0 0
    %357 = vmatpush1.bf16.msra.mxu0 0
    %358 = vmatprep.subr.bf16.mxu0 0
    %359 = vmatpush1.bf16.msra.mxu0 0
    %360 = vmatprep.subr.bf16.mxu0 0
    %361 = vmatpush1.bf16.msra.mxu0 0
    %362 = vmatprep.subr.bf16.mxu0 0
    %363 = vmatpush1.bf16.msra.mxu0 0
    %364 = vmatprep.subr.bf16.mxu0 0
    %365 = vmatpush1.bf16.msra.mxu0 0
    %366 = vmatprep.subr.bf16.mxu0 0
    %367 = vmatpush1.bf16.msra.mxu0 0
    %368 = vmatprep.subr.bf16.mxu0 0
    %369 = vmatpush1.bf16.msra.mxu0 0
    %370 = vmatprep.subr.bf16.mxu0 0
    %371 = vmatpush1.bf16.msra.mxu0 0
    %372 = vmatprep.subr.bf16.mxu0 0
    %373 = vmatpush1.bf16.msra.mxu0 0
    %374 = vmatprep.subr.bf16.mxu0 0
    %375 = vmatpush1.bf16.msra.mxu0 0
    %376 = vmatprep.subr.bf16.mxu0 0
    %377 = vmatpush1.bf16.msra.mxu0 0
    %378 = vmatprep.subr.bf16.mxu0 0
    %379 = vmatpush1.bf16.msra.mxu0 0
    %380 = vmatprep.subr.bf16.mxu0 0
    %381 = vmatpush1.bf16.msra.mxu0 0
    %382 = vmatprep.subr.bf16.mxu0 0
    %383 = vmatpush1.bf16.msra.mxu0 0
    %384 = vmatprep.subr.bf16.mxu0 0
    %385 = vmatpush1.bf16.msra.mxu0 0
    %386 = vmatprep.mubr.bf16.mxu0 0
    %387 = vmatmul.mubr.bf16.gmra.mrb[0].mxu0 %v348
    %v388 = vpop.f32.mrb[0].mxu0
    %v389 = vadd.f32 0.0, %v388
    %v390 = vpop.f32.mrb[0].mxu0
    %v391 = vpop.f32.mrb[0].mxu0
    %v392 = vpop.f32.mrb[0].mxu0
    %393 = vdwg.mxu0
    %v395 = vsel %vm314, %v346, 0
    %v398 = vsel %vm350, %v209, 0
    %400 = vmatprep.subr.bf16.mxu0 0
    %401 = vmatpush1.bf16.msra.mxu0 %v398
    %402 = vmatprep.subr.bf16.mxu0 0
    %403 = vmatpush1.bf16.msra.mxu0 0
    %404 = vmatprep.subr.bf16.mxu0 0
    %405 = vmatpush1.bf16.msra.mxu0 0
    %406 = vmatprep.subr.bf16.mxu0 0
    %407 = vmatpush1.bf16.msra.mxu0 0
    %408 = vmatprep.subr.bf16.mxu0 0
    %409 = vmatpush1.bf16.msra.mxu0 0
    %410 = vmatprep.subr.bf16.mxu0 0
    %411 = vmatpush1.bf16.msra.mxu0 0
    %412 = vmatprep.subr.bf16.mxu0 0
    %413 = vmatpush1.bf16.msra.mxu0 0
    %414 = vmatprep.subr.bf16.mxu0 0
    %415 = vmatpush1.bf16.msra.mxu0 0
    %416 = vmatprep.subr.bf16.mxu0 0
    %417 = vmatpush1.bf16.msra.mxu0 0
    %418 = vmatprep.subr.bf16.mxu0 0
    %419 = vmatpush1.bf16.msra.mxu0 0
    %420 = vmatprep.subr.bf16.mxu0 0
    %421 = vmatpush1.bf16.msra.mxu0 0
    %422 = vmatprep.subr.bf16.mxu0 0
    %423 = vmatpush1.bf16.msra.mxu0 0
    %424 = vmatprep.subr.bf16.mxu0 0
    %425 = vmatpush1.bf16.msra.mxu0 0
    %426 = vmatprep.subr.bf16.mxu0 0
    %427 = vmatpush1.bf16.msra.mxu0 0
    %428 = vmatprep.subr.bf16.mxu0 0
    %429 = vmatpush1.bf16.msra.mxu0 0
    %430 = vmatprep.subr.bf16.mxu0 0
    %431 = vmatpush1.bf16.msra.mxu0 0
    %432 = vmatprep.mubr.bf16.mxu0 0
    %433 = vmatmul.mubr.bf16.gmra.mrb[0].mxu0 %v395
    %v434 = vpop.f32.mrb[0].mxu0
    %v435 = vadd.f32 0.0, %v434
    %v436 = vpop.f32.mrb[0].mxu0
    %v437 = vpop.f32.mrb[0].mxu0
    %v438 = vpop.f32.mrb[0].mxu0
    %439 = vdwg.mxu0
    %440 = vst.msk [vmem:[#allocation2] sm:$0xff] %vm210, %v389
    %441 = vst.msk [vmem:[#allocation2 + $0x8] sm:$0xff] %vm210, %v435
    // Predicated region
    $region22: #{tpu_custom_call.1} parent=1 // pred_check
      _
    $region23: #{tpu_custom_call.1} parent=1 // pred_check_branch
      %443 = sbr.rel (0) target = $region25
    $region24: #{tpu_custom_call.1} parent=1 // pred_region
      %s445 = ssub.s32 256, 256
      %446 = vsyncadd [#allocation3], %s445
      %s447 = sshll.u32 [#allocation2], 4
      %s448 = int_to_ptr.vmem [resolvable:$true] %s447
      %453 = dma.vmem_to_hbm [thread:$0]  %s448, 256, %s5, [#allocation3], 128, 128, 8
    $region25: #{tpu_custom_call.1} parent=1 // pred_fallthru
      _
    // Predicated region
    $region26: #{tpu_custom_call.1} parent=1 // pred_check
      _
    $region27: #{tpu_custom_call.1} parent=1 // pred_check_branch
      %455 = sbr.rel (0) target = $region29
    $region28: #{tpu_custom_call.1} parent=1 // pred_region
      %456 = dma.done [#allocation3], 256
    $region29: #{tpu_custom_call.1} parent=1 // pred_fallthru
      _
    %457 = vsyncpa [#allocation3], 1

</llo_original>
